<compile_context>
chip_gen: v7x
topology: tpu7x:2x2x1
jax: 0.10.0
libtpu: 0.0.40
codegen_flags: <defaults>
</compile_context>

<pallas_src>
import jax
import jax.numpy as jnp
from jax import lax
from jax.experimental import pallas as pl
from jax.experimental.pallas import tpu as pltpu


def _round_up(x, m):
    return ((x + m - 1) // m) * m


def _choose_tb(batch, q_dim, v_dim, itemsize=4, vmem_budget=12 * 1024 * 1024):
    """Largest batch tile whose double-buffered working set fits a conservative
    VMEM budget (12 MiB < the 16 MiB v5e scoped default, and well under
    v6e/v7x defaults)."""
    b8 = _round_up(max(batch, 1), 8)
    tb = 8
    for cand in (1024, 768, 512, 384, 256, 128, 64, 32, 16, 8):
        # resident-but-double-buffered weight + 2x (query + value + output) tiles
        footprint = (2 * q_dim * v_dim + 2 * cand * (q_dim + 2 * v_dim)) * itemsize
        if footprint <= vmem_budget:
            tb = cand
            break
    if tb >= b8:
        # Whole (padded) batch fits in one tile.  Keep >=2 grid steps when there
        # is enough work so the "parallel" axis can shard across v7x's 2 TCs.
        tb = b8 if b8 <= 256 else _round_up((b8 + 1) // 2, 8)
    return tb


def _attention_kernel(q_ref, w_ref, v_ref, o_ref):
    # q_ref : (tb, Q)   query tile
    # w_ref : (V,  Q)   Linear weight in native PyTorch layout (resident)
    # v_ref : (tb, V)   value tile
    # o_ref : (tb, V)   output tile
    # logits[b, v] = sum_q q[b, q] * w[v, q]   ("NT" matmul, MXU)
    logits = lax.dot_general(
        q_ref[...],
        w_ref[...],
        dimension_numbers=(((1,), (1,)), ((), ())),
        preferred_element_type=jnp.float32,
    )
    attn = jax.nn.sigmoid(logits)                       # EUP, f32
    o_ref[...] = (v_ref[...].astype(jnp.float32) * attn).astype(o_ref.dtype)


def attention_forward(query_emb, value_emb, weight, *, tb=None):
    """query_emb: [B, Q], value_emb: [B, V], weight: [V, Q] (PyTorch Linear layout)."""
    B, Q = query_emb.shape
    Bv, V = value_emb.shape
    assert Bv == B
    assert weight.shape == (V, Q)

    out_dtype = value_emb.dtype
    itemsize = jnp.dtype(out_dtype).itemsize

    # Lane-dense output: pad value_dim up to a multiple of 128 (unmasked vst).
    Vp = _round_up(V, 128)
    if Vp != V:
        value_emb = jnp.pad(value_emb, ((0, 0), (0, Vp - V)))
        weight = jnp.pad(weight, ((0, Vp - V), (0, 0)))

    if tb is None:
        tb = _choose_tb(B, Q, Vp, itemsize)

    # Pad batch up to a multiple of tb (no divisibility requirement on callers).
    Bp = _round_up(B, tb)
    if Bp != B:
        query_emb = jnp.pad(query_emb, ((0, Bp - B), (0, 0)))
        value_emb = jnp.pad(value_emb, ((0, Bp - B), (0, 0)))

    grid = (Bp // tb,)

    out = pl.pallas_call(
        _attention_kernel,
        out_shape=jax.ShapeDtypeStruct((Bp, Vp), out_dtype),
        grid_spec=pltpu.PrefetchScalarGridSpec(
            num_scalar_prefetch=0,
            grid=grid,
            in_specs=[
                pl.BlockSpec((tb, Q), lambda i: (i, 0)),    # query tile
                pl.BlockSpec((Vp, Q), lambda i: (0, 0)),    # full weight, resident
                pl.BlockSpec((tb, Vp), lambda i: (i, 0)),   # value tile
            ],
            out_specs=pl.BlockSpec((tb, Vp), lambda i: (i, 0)),
        ),
        compiler_params=pltpu.CompilerParams(
            dimension_semantics=("parallel",),
        ),
        cost_estimate=pl.CostEstimate(
            flops=2 * Bp * Q * Vp,
            transcendentals=Bp * Vp,
            bytes_accessed=(Bp * Q + Vp * Q + 2 * Bp * Vp) * itemsize,
        ),
    )(query_emb, weight, value_emb)

    if Bp != B or Vp != V:
        out = out[:B, :V]
    return out


if __name__ == "__main__":
    # --- Small, deterministic example consistent with the module ---
    B, QUERY_DIM, VALUE_DIM = 8, 32, 128

    key = jax.random.PRNGKey(0)
    k_q, k_v, k_w = jax.random.split(key, 3)

    query_emb = jax.random.normal(k_q, (B, QUERY_DIM), dtype=jnp.float32)
    value_emb = jax.random.normal(k_v, (B, VALUE_DIM), dtype=jnp.float32)
    # nn.Linear(query_dim, value_dim).weight has shape [value_dim, query_dim]
    bound = 1.0 / (QUERY_DIM ** 0.5)
    weight = jax.random.uniform(
        k_w, (VALUE_DIM, QUERY_DIM), dtype=jnp.float32, minval=-bound, maxval=bound
    )

    out = attention_forward(query_emb, value_emb, weight)
    out = jax.block_until_ready(out)

    ref = value_emb * jax.nn.sigmoid(query_emb @ weight.T)
    assert out.shape == (B, VALUE_DIM)
    assert jnp.allclose(out, ref, atol=1e-5, rtol=1e-5)

    # --- Ragged-shape check: batch not multiple of tile, value_dim not mult of 128 ---
    B2, Q2, V2 = 10, 20, 96
    k_q2, k_v2, k_w2 = jax.random.split(jax.random.PRNGKey(1), 3)
    q2 = jax.random.normal(k_q2, (B2, Q2), dtype=jnp.float32)
    v2 = jax.random.normal(k_v2, (B2, V2), dtype=jnp.float32)
    w2 = jax.random.uniform(
        k_w2, (V2, Q2), dtype=jnp.float32, minval=-1.0 / (Q2 ** 0.5), maxval=1.0 / (Q2 ** 0.5)
    )
    out2 = jax.block_until_ready(attention_forward(q2, v2, w2))
    ref2 = v2 * jax.nn.sigmoid(q2 @ w2.T)
    assert out2.shape == (B2, V2)
    assert jnp.allclose(out2, ref2, atol=1e-5, rtol=1e-5)

    print("KERNEL_OK")
</pallas_src>

<mosaic_0001>
module attributes {stable_mosaic.version = 11 : i64} {
  func.func @_attention_kernel(%arg0: i32, %arg1: memref<8x32xf32, #tpu.memory_space<vmem>>, %arg2: memref<128x32xf32, #tpu.memory_space<vmem>>, %arg3: memref<8x128xf32, #tpu.memory_space<vmem>>, %arg4: memref<8x128xf32, #tpu.memory_space<vmem>>) attributes {dimension_semantics = [#tpu.dimension_semantics<parallel>], iteration_bounds = array<i64: 1>, scalar_prefetch = 0 : i64, scratch_operands = 0 : i64, tpu.core_type = #tpu.core_type<tc>, window_params = [{transform_indices = @transform_0, window_bounds = array<i64: 8, 32>}, {pipeline_mode = #tpu.pipeline_mode<synchronous>, transform_indices = @transform_1, window_bounds = array<i64: 128, 32>}, {transform_indices = @transform_2, window_bounds = array<i64: 8, 128>}, {transform_indices = @transform_3, window_bounds = array<i64: 8, 128>}]} {
    %c0 = arith.constant 0 : index
    %c0_0 = arith.constant 0 : index
    %0 = vector.load %arg1[%c0, %c0_0] : memref<8x32xf32, #tpu.memory_space<vmem>>, vector<8x32xf32>
    %c0_1 = arith.constant 0 : index
    %c0_2 = arith.constant 0 : index
    %1 = vector.load %arg2[%c0_1, %c0_2] : memref<128x32xf32, #tpu.memory_space<vmem>>, vector<128x32xf32>
    %cst = arith.constant dense<0.000000e+00> : vector<8x128xf32>
    %2 = tpu.matmul %0, %1, %cst {dimension_numbers = #tpu.dot_dimension_numbers<[1], [1], [0], [0], [0, 0, 1, 0], [], []>} : vector<8x32xf32>, vector<128x32xf32>, vector<8x128xf32> -> vector<8x128xf32>
    %3 = arith.negf %2 : vector<8x128xf32>
    %4 = math.exp %3 : vector<8x128xf32>
    %cst_3 = arith.constant 1.000000e+00 : f32
    %5 = vector.broadcast %cst_3 : f32 to vector<8x128xf32>
    %6 = arith.addf %5, %4 : vector<8x128xf32>
    %7 = arith.divf %5, %6 : vector<8x128xf32>
    %c0_4 = arith.constant 0 : index
    %c0_5 = arith.constant 0 : index
    %8 = vector.load %arg3[%c0_4, %c0_5] : memref<8x128xf32, #tpu.memory_space<vmem>>, vector<8x128xf32>
    %9 = arith.mulf %8, %7 : vector<8x128xf32>
    %c0_6 = arith.constant 0 : index
    %c0_7 = arith.constant 0 : index
    %10 = vector.load %arg4[%c0_6, %c0_7] : memref<8x128xf32, #tpu.memory_space<vmem>>, vector<8x128xf32>
    tpu.vector_store %arg4[%c0_6, %c0_7], %9 {strides = array<i32>} : memref<8x128xf32, #tpu.memory_space<vmem>>, vector<8x128xf32>,
    return
  }
  func.func @transform_0(%arg0: i32) -> (i32, i32) {
    %c0_i32 = arith.constant 0 : i32
    %c0_i32_0 = arith.constant 0 : i32
    return %arg0, %c0_i32 : i32, i32
  }
  func.func @transform_1(%arg0: i32) -> (i32, i32) {
    %c0_i32 = arith.constant 0 : i32
    %c0_i32_0 = arith.constant 0 : i32
    %c0_i32_1 = arith.constant 0 : i32
    return %c0_i32, %c0_i32_0 : i32, i32
  }
  func.func @transform_2(%arg0: i32) -> (i32, i32) {
    %c0_i32 = arith.constant 0 : i32
    %c0_i32_0 = arith.constant 0 : i32
    return %arg0, %c0_i32 : i32, i32
  }
  func.func @transform_3(%arg0: i32) -> (i32, i32) {
    %c0_i32 = arith.constant 0 : i32
    %c0_i32_0 = arith.constant 0 : i32
    return %arg0, %c0_i32 : i32, i32
  }
}

</mosaic_0001>

<llo_original>
// kernel: tpu_custom_call.1
$region0: #{tpu_custom_call.1}
  #allocation0 [shape = 'u32[]', space=smem, size = 0x4, offset = 0x4, fixed_abs, tag = 'smem constant byte address 0x4 - core index']
  #allocation1 [shape = 'u32[144,128]{1,0:T(1,128)}', space=vmem, size = 0x12000, scoped, tag = 'internal scratch']
  %s0 = inlined_call_operand.vmem [shape: f32[8,32], index: 0, kind: input, shape index: {}]
  %s1 = inlined_call_operand.vmem [shape: f32[128,32], index: 1, kind: input, shape index: {}]
  %s2 = inlined_call_operand.vmem [shape: f32[8,128], index: 2, kind: input, shape index: {}]
  %s3 = inlined_call_operand.hbm [shape: f32[8,128], index: 3, kind: output, shape index: {}]
  %s4 = sld [smem:[#allocation0]]
  $region22: #{tpu_custom_call.1} parent=0
    _
  %s6 = ssub.s32 1, %s4
  %s7 = scalar_select 0, %s6, %s4
  $region1: #{tpu_custom_call.1} parent=0
    #allocation2 [shape = 'u8[4096]{0}', space=vmem, size = 0x1000, scoped, tag = 'output window, operand 0, single buffered']
    #allocation3 [shape = 's32[1]{0}', space=sflag, size = 0x4, scoped, tag = 'scoped memory for tpu_custom_call.1']
    %8 = vsyncpa [#allocation3], 0
    // Predicated region
    $region2: #{tpu_custom_call.1} parent=1 // pred_check
      _
    $region3: #{tpu_custom_call.1} parent=1 // pred_check_branch
      %10 = sbr.rel (0) target = $region5
    $region4: #{tpu_custom_call.1} parent=1 // pred_region
      _
    $region5: #{tpu_custom_call.1} parent=1 // pred_fallthru
      _
    // Predicated region
    $region6: #{tpu_custom_call.1} parent=1 // pred_check
      _
    $region7: #{tpu_custom_call.1} parent=1 // pred_check_branch
      %12 = sbr.rel (0) target = $region9
    $region8: #{tpu_custom_call.1} parent=1 // pred_region
      _
    $region9: #{tpu_custom_call.1} parent=1 // pred_fallthru
      _
    // Predicated region
    $region10: #{tpu_custom_call.1} parent=1 // pred_check
      _
    $region11: #{tpu_custom_call.1} parent=1 // pred_check_branch
      %14 = sbr.rel (0) target = $region13
    $region12: #{tpu_custom_call.1} parent=1 // pred_region
      _
    $region13: #{tpu_custom_call.1} parent=1 // pred_fallthru
      _
    %v15 = vld [vmem:[%s0] sm:$0xff]
    %v16 = vld [vmem:[%s1] sm:$0xff]
    %v17 = vld [vmem:[%s1 + $0x8] sm:$0xff]
    %v18 = vld [vmem:[%s1 + $0x10] sm:$0xff]
    %v19 = vld [vmem:[%s1 + $0x18] sm:$0xff]
    %v20 = vld [vmem:[%s1 + $0x20] sm:$0xff]
    %v21 = vld [vmem:[%s1 + $0x28] sm:$0xff]
    %v22 = vld [vmem:[%s1 + $0x30] sm:$0xff]
    %v23 = vld [vmem:[%s1 + $0x38] sm:$0xff]
    %v24 = vld [vmem:[%s1 + $0x40] sm:$0xff]
    %v25 = vld [vmem:[%s1 + $0x48] sm:$0xff]
    %v26 = vld [vmem:[%s1 + $0x50] sm:$0xff]
    %v27 = vld [vmem:[%s1 + $0x58] sm:$0xff]
    %v28 = vld [vmem:[%s1 + $0x60] sm:$0xff]
    %v29 = vld [vmem:[%s1 + $0x68] sm:$0xff]
    %v30 = vld [vmem:[%s1 + $0x70] sm:$0xff]
    %v31 = vld [vmem:[%s1 + $0x78] sm:$0xff]
    %vm32 = vcmask 261120
    %v34 = vsel %vm32, %v15, 0
    %v37 = vsel %vm32, %v16, 0
    %v40 = vsel %vm32, %v17, 0
    %v43 = vsel %vm32, %v18, 0
    %v46 = vsel %vm32, %v19, 0
    %v49 = vsel %vm32, %v20, 0
    %v52 = vsel %vm32, %v21, 0
    %v55 = vsel %vm32, %v22, 0
    %v58 = vsel %vm32, %v23, 0
    %v61 = vsel %vm32, %v24, 0
    %v64 = vsel %vm32, %v25, 0
    %v67 = vsel %vm32, %v26, 0
    %v70 = vsel %vm32, %v27, 0
    %v73 = vsel %vm32, %v28, 0
    %v76 = vsel %vm32, %v29, 0
    %v79 = vsel %vm32, %v30, 0
    %v82 = vsel %vm32, %v31, 0
    %84 = vmatprep.subr.mxu0 0.0
    %85 = vmatpush1.xpose.msra.mxu0 %v37
    %86 = vmatprep.subr.mxu0 0.0
    %87 = vmatpush1.xpose.msra.mxu0 %v40
    %88 = vmatprep.subr.mxu0 0.0
    %89 = vmatpush1.xpose.msra.mxu0 %v43
    %90 = vmatprep.subr.mxu0 0.0
    %91 = vmatpush1.xpose.msra.mxu0 %v46
    %92 = vmatprep.subr.mxu0 0.0
    %93 = vmatpush1.xpose.msra.mxu0 %v49
    %94 = vmatprep.subr.mxu0 0.0
    %95 = vmatpush1.xpose.msra.mxu0 %v52
    %96 = vmatprep.subr.mxu0 0.0
    %97 = vmatpush1.xpose.msra.mxu0 %v55
    %98 = vmatprep.subr.mxu0 0.0
    %99 = vmatpush1.xpose.msra.mxu0 %v58
    %100 = vmatprep.subr.mxu0 0.0
    %101 = vmatpush1.xpose.msra.mxu0 %v61
    %102 = vmatprep.subr.mxu0 0.0
    %103 = vmatpush1.xpose.msra.mxu0 %v64
    %104 = vmatprep.subr.mxu0 0.0
    %105 = vmatpush1.xpose.msra.mxu0 %v67
    %106 = vmatprep.subr.mxu0 0.0
    %107 = vmatpush1.xpose.msra.mxu0 %v70
    %108 = vmatprep.subr.mxu0 0.0
    %109 = vmatpush1.xpose.msra.mxu0 %v73
    %110 = vmatprep.subr.mxu0 0.0
    %111 = vmatpush1.xpose.msra.mxu0 %v76
    %112 = vmatprep.subr.mxu0 0.0
    %113 = vmatpush1.xpose.msra.mxu0 %v79
    %114 = vmatprep.subr.mxu0 0.0
    %115 = vmatpush1.xpose.msra.mxu0 %v82
    %116 = vmatprep.subr.mxu0 0.0
    %117 = vmatpush1.xpose.msra.mxu0 0.0
    %118 = vmatprep.subr.mxu0 0.0
    %119 = vmatpush1.xpose.msra.mxu0 0.0
    %120 = vmatprep.subr.mxu0 0.0
    %121 = vmatpush1.xpose.msra.mxu0 0.0
    %122 = vmatprep.subr.mxu0 0.0
    %123 = vmatpush1.xpose.msra.mxu0 0.0
    %124 = vmatprep.subr.mxu0 0.0
    %125 = vmatpush1.xpose.msra.mxu0 0.0
    %126 = vmatprep.subr.mxu0 0.0
    %127 = vmatpush1.xpose.msra.mxu0 0.0
    %128 = vmatprep.subr.mxu0 0.0
    %129 = vmatpush1.xpose.msra.mxu0 0.0
    %130 = vmatprep.subr.mxu0 0.0
    %131 = vmatpush1.xpose.msra.mxu0 0.0
    %132 = vmatprep.subr.mxu0 0.0
    %133 = vmatpush1.xpose.msra.mxu0 0.0
    %134 = vmatprep.subr.mxu0 0.0
    %135 = vmatpush1.xpose.msra.mxu0 0.0
    %136 = vmatprep.subr.mxu0 0.0
    %137 = vmatpush1.xpose.msra.mxu0 0.0
    %138 = vmatprep.subr.mxu0 0.0
    %139 = vmatpush1.xpose.msra.mxu0 0.0
    %140 = vmatprep.subr.mxu0 0.0
    %141 = vmatpush1.xpose.msra.mxu0 0.0
    %142 = vmatprep.subr.mxu0 0.0
    %143 = vmatpush1.xpose.msra.mxu0 0.0
    %144 = vmatprep.subr.mxu0 0.0
    %145 = vmatpush1.xpose.msra.mxu0 0.0
    %146 = vmatprep.subr.mxu0 0.0
    %147 = vmatpush1.xpose.msra.mxu0 0.0
    %148 = vmatprep.mubr.f32.mxu0 0.0
    %149 = vmatmul.mubr.f32.gmra.mrb[0].mxu0 %v34
    %v150 = vpop.f32.mrb[0].mxu0
    %v151 = vadd.f32 0.0, %v150
    %v152 = vpop.f32.mrb[0].mxu0
    %153 = vdwg.mxu0
    %v154 = vxor.u32 %v151, 2147483648
    %v155 = vmul.f32 %v154, 1.442695
    %v156 = vpow.pop %v155
    %v157 = vadd.f32 %v156, 1.0
    %v158 = vrcp.pop %v157
    %v159 = vmul.f32 1.0, %v158
    %v160 = vld [vmem:[%s2] sm:$0xff]
    %v161 = vmul.f32 %v160, %v159
    %162 = vst [vmem:[#allocation2] sm:$0xff] %v161
    // Predicated region
    $region14: #{tpu_custom_call.1} parent=1 // pred_check
      _
    $region15: #{tpu_custom_call.1} parent=1 // pred_check_branch
      %164 = sbr.rel (0) target = $region17
    $region16: #{tpu_custom_call.1} parent=1 // pred_region
      %s166 = ssub.s32 128, 128
      %167 = vsyncadd [#allocation3], %s166
      %s169 = sshll.u32 [#allocation2], 4
      %s170 = int_to_ptr.vmem [resolvable:$true] %s169
      %172 = dma.vmem_to_hbm [thread:$0]  %s170, 128, %s3, [#allocation3]
    $region17: #{tpu_custom_call.1} parent=1 // pred_fallthru
      _
    // Predicated region
    $region18: #{tpu_custom_call.1} parent=1 // pred_check
      _
    $region19: #{tpu_custom_call.1} parent=1 // pred_check_branch
      %174 = sbr.rel (0) target = $region21
    $region20: #{tpu_custom_call.1} parent=1 // pred_region
      %175 = dma.done [#allocation3], 128
    $region21: #{tpu_custom_call.1} parent=1 // pred_fallthru
      _
    %176 = vsyncpa [#allocation3], 1

</llo_original>
